<compile_context>
chip_gen: v7x
topology: tpu7x:2x2x1
jax: 0.10.0
libtpu: 0.0.40
codegen_flags: <defaults>
</compile_context>

<pallas_src>
import jax
import jax.numpy as jnp
from jax import lax
from jax.experimental import pallas as pl
from jax.experimental.pallas import tpu as pltpu


FEAT_DIM = 1280      # self.feat_dim (EfficientNet-B1 trunk channels)
NUM_CLASSES = 10     # n_classes (small demo value)


def _pool_fc_kernel(fm_ref, w_ref, b_ref, feat_ref, out_ref):
    """Fused global-average-pool + flatten + Linear for one batch block.

    fm_ref:   (Bt, S, C)       trunk feature map, spatial flattened, C on lanes
    w_ref:    (n_classes, C)   native nn.Linear weight layout (no transpose)
    b_ref:    (1, n_classes)
    feat_ref: (Bt, C)          pooled+flattened feature (first forward() output)
    out_ref:  (Bt, n_classes)  fc_layer output (second forward() output)
    """
    fm = fm_ref[...]
    s = fm.shape[1]
    # AdaptiveAvgPool2d(1) + view(B, -1): mean over the flattened spatial axis
    # (sublane reduce; channels stay dense on the lane axis).
    feat = jnp.sum(fm, axis=1) * (1.0 / s)                    # (Bt, C)
    feat_ref[...] = feat.astype(feat_ref.dtype)
    # fc_layer: contract the lane axis (C) of both operands -> (Bt, n_classes).
    res = lax.dot_general(
        feat, w_ref[...],
        dimension_numbers=(((1,), (1,)), ((), ())),
        preferred_element_type=jnp.float32,
    )
    out_ref[...] = (res + b_ref[...]).astype(out_ref.dtype)


def efficientnet_b1_forward(feat_map, w, b, *, batch_tile=128):
    """Replicates EfficientNet_b1.forward AFTER the conv trunk.

    feat_map: (B, 1280, Hf, Wf) f32 — output of `model.features` (the trunk)
    w:        (n_classes, 1280) f32 — nn.Linear weight (native layout)
    b:        (n_classes,) f32
    returns:  (feature, res) = ((B, 1280), (B, n_classes))
    """
    batch, chan, hf, wf = feat_map.shape
    s = hf * wf
    n_cls = w.shape[0]

    # Tiny glue: NCHW -> (B, S, C) so channels (the contraction dim) land on
    # the 128-lane axis and the spatial axis S is the sublane-reduced axis.
    fm = jnp.transpose(feat_map, (0, 2, 3, 1)).reshape(batch, s, chan)
    b2 = b.reshape(1, -1)

    # One batch block per grid step; at batch=2 this collapses to one step.
    bt = batch_tile if (batch > batch_tile and batch % batch_tile == 0) else batch
    grid = (batch // bt,)

    feature, out = pl.pallas_call(
        _pool_fc_kernel,
        out_shape=(
            jax.ShapeDtypeStruct((batch, chan), feat_map.dtype),
            jax.ShapeDtypeStruct((batch, n_cls), feat_map.dtype),
        ),
        grid=grid,
        in_specs=[
            pl.BlockSpec((bt, s, chan), lambda i: (i, 0, 0)),
            pl.BlockSpec((n_cls, chan), lambda i: (0, 0)),
            pl.BlockSpec((1, n_cls), lambda i: (0, 0)),
        ],
        out_specs=(
            pl.BlockSpec((bt, chan), lambda i: (i, 0)),
            pl.BlockSpec((bt, n_cls), lambda i: (i, 0)),
        ),
        compiler_params=pltpu.CompilerParams(
            dimension_semantics=("parallel",),   # shards batch across v7x TCs
        ),
    )(fm, w, b2)
    return feature, out


def _reference(feat_map, w, b):
    feature = jnp.mean(feat_map, axis=(2, 3))
    out = feature @ w.T + b
    return feature, out


if __name__ == "__main__":
    key = jax.random.PRNGKey(0)
    kx, kw, kb = jax.random.split(key, 3)

    # Trunk output for a 64x64 image: (B, 1280, 64/32, 64/32) = (2, 1280, 2, 2).
    batch, hf, wf = 2, 2, 2
    x = jax.random.normal(kx, (batch, FEAT_DIM, hf, wf), dtype=jnp.float32)

    # Deterministic nn.Linear-style init: U(-1/sqrt(fan_in), 1/sqrt(fan_in)).
    bound = 1.0 / (FEAT_DIM ** 0.5)
    w = jax.random.uniform(
        kw, (NUM_CLASSES, FEAT_DIM), minval=-bound, maxval=bound, dtype=jnp.float32
    )
    b = jax.random.uniform(
        kb, (NUM_CLASSES,), minval=-bound, maxval=bound, dtype=jnp.float32
    )

    feature, out = jax.jit(efficientnet_b1_forward)(x, w, b)
    jax.block_until_ready((feature, out))

    # Sanity check against pure-JAX reference.
    feat_ref, out_ref = _reference(x, w, b)
    assert feature.shape == (batch, FEAT_DIM)
    assert out.shape == (batch, NUM_CLASSES)
    assert jnp.allclose(feature, feat_ref, atol=1e-5, rtol=1e-5)
    assert jnp.allclose(out, out_ref, atol=1e-4, rtol=1e-4)

    print("KERNEL_OK")
</pallas_src>

<mosaic_0001>
module attributes {stable_mosaic.version = 11 : i64} {
  func.func @_pool_fc_kernel(%arg0: i32, %arg1: memref<2x4x1280xf32, #tpu.memory_space<vmem>>, %arg2: memref<10x1280xf32, #tpu.memory_space<vmem>>, %arg3: memref<1x10xf32, #tpu.memory_space<vmem>>, %arg4: memref<2x1280xf32, #tpu.memory_space<vmem>>, %arg5: memref<2x10xf32, #tpu.memory_space<vmem>>) attributes {dimension_semantics = [#tpu.dimension_semantics<parallel>], iteration_bounds = array<i64: 1>, scalar_prefetch = 0 : i64, scratch_operands = 0 : i64, tpu.core_type = #tpu.core_type<tc>, window_params = [{transform_indices = @transform_0, window_bounds = array<i64: 2, 4, 1280>}, {pipeline_mode = #tpu.pipeline_mode<synchronous>, transform_indices = @transform_1, window_bounds = array<i64: 10, 1280>}, {pipeline_mode = #tpu.pipeline_mode<synchronous>, transform_indices = @transform_2, window_bounds = array<i64: 1, 10>}, {transform_indices = @transform_3, window_bounds = array<i64: 2, 1280>}, {transform_indices = @transform_4, window_bounds = array<i64: 2, 10>}]} {
    %c0 = arith.constant 0 : index
    %c0_0 = arith.constant 0 : index
    %c0_1 = arith.constant 0 : index
    %0 = vector.load %arg1[%c0, %c0_0, %c0_1] : memref<2x4x1280xf32, #tpu.memory_space<vmem>>, vector<2x4x1280xf32>
    %cst = arith.constant dense<0.000000e+00> : vector<2x1280xf32>
    %1 = vector.multi_reduction <add>, %0, %cst [1] : vector<2x4x1280xf32> to vector<2x1280xf32>
    %cst_2 = arith.constant 2.500000e-01 : f32
    %2 = vector.broadcast %cst_2 : f32 to vector<2x1280xf32>
    %3 = arith.mulf %1, %2 : vector<2x1280xf32>
    %c0_3 = arith.constant 0 : index
    %c0_4 = arith.constant 0 : index
    %4 = vector.load %arg4[%c0_3, %c0_4] : memref<2x1280xf32, #tpu.memory_space<vmem>>, vector<2x1280xf32>
    tpu.vector_store %arg4[%c0_3, %c0_4], %3 {strides = array<i32>} : memref<2x1280xf32, #tpu.memory_space<vmem>>, vector<2x1280xf32>,
    %c0_5 = arith.constant 0 : index
    %c0_6 = arith.constant 0 : index
    %5 = vector.load %arg2[%c0_5, %c0_6] : memref<10x1280xf32, #tpu.memory_space<vmem>>, vector<10x1280xf32>
    %cst_7 = arith.constant dense<0.000000e+00> : vector<2x10xf32>
    %6 = tpu.matmul %3, %5, %cst_7 {dimension_numbers = #tpu.dot_dimension_numbers<[1], [1], [0], [0], [0, 0, 1, 0], [], []>} : vector<2x1280xf32>, vector<10x1280xf32>, vector<2x10xf32> -> vector<2x10xf32>
    %c0_8 = arith.constant 0 : index
    %c0_9 = arith.constant 0 : index
    %7 = vector.load %arg3[%c0_8, %c0_9] : memref<1x10xf32, #tpu.memory_space<vmem>>, vector<1x10xf32>
    %8 = vector.broadcast %7 : vector<1x10xf32> to vector<2x10xf32>
    %9 = arith.addf %6, %8 : vector<2x10xf32>
    %c0_10 = arith.constant 0 : index
    %c0_11 = arith.constant 0 : index
    %10 = vector.load %arg5[%c0_10, %c0_11] : memref<2x10xf32, #tpu.memory_space<vmem>>, vector<2x10xf32>
    tpu.vector_store %arg5[%c0_10, %c0_11], %9 {strides = array<i32>} : memref<2x10xf32, #tpu.memory_space<vmem>>, vector<2x10xf32>,
    return
  }
  func.func @transform_0(%arg0: i32) -> (i32, i32, i32) {
    %c0_i32 = arith.constant 0 : i32
    %c0_i32_0 = arith.constant 0 : i32
    %c0_i32_1 = arith.constant 0 : i32
    return %arg0, %c0_i32, %c0_i32_0 : i32, i32, i32
  }
  func.func @transform_1(%arg0: i32) -> (i32, i32) {
    %c0_i32 = arith.constant 0 : i32
    %c0_i32_0 = arith.constant 0 : i32
    %c0_i32_1 = arith.constant 0 : i32
    return %c0_i32, %c0_i32_0 : i32, i32
  }
  func.func @transform_2(%arg0: i32) -> (i32, i32) {
    %c0_i32 = arith.constant 0 : i32
    %c0_i32_0 = arith.constant 0 : i32
    %c0_i32_1 = arith.constant 0 : i32
    return %c0_i32, %c0_i32_0 : i32, i32
  }
  func.func @transform_3(%arg0: i32) -> (i32, i32) {
    %c0_i32 = arith.constant 0 : i32
    %c0_i32_0 = arith.constant 0 : i32
    return %arg0, %c0_i32 : i32, i32
  }
  func.func @transform_4(%arg0: i32) -> (i32, i32) {
    %c0_i32 = arith.constant 0 : i32
    %c0_i32_0 = arith.constant 0 : i32
    return %arg0, %c0_i32 : i32, i32
  }
}

</mosaic_0001>

<llo_original>
// kernel: efficientnet_b1_forward.1
$region0: #{efficientnet_b1_forward.1}
  #allocation0 [shape = 'u32[]', space=smem, size = 0x4, offset = 0x4, fixed_abs, tag = 'smem constant byte address 0x4 - core index']
  #allocation1 [shape = 'u32[144,128]{1,0:T(1,128)}', space=vmem, size = 0x12000, scoped, tag = 'internal scratch']
  %s0 = inlined_call_operand.vmem [shape: f32[2,4,1280], index: 0, kind: input, shape index: {}]
  %s1 = inlined_call_operand.vmem [shape: f32[10,1280], index: 1, kind: input, shape index: {}]
  %s2 = inlined_call_operand.vmem [shape: f32[1,10], index: 2, kind: input, shape index: {}]
  %s3 = inlined_call_operand.hbm [shape: f32[2,1280], index: 3, kind: output, shape index: {0}]
  %s4 = inlined_call_operand.hbm [shape: f32[2,10], index: 4, kind: output, shape index: {1}]
  %5 = xla_tuple %s3, %s4
  %s6 = sld [smem:[#allocation0]]
  $region30: #{efficientnet_b1_forward.1} parent=0
    _
  %s8 = ssub.s32 1, %s6
  %s9 = scalar_select 0, %s8, %s6
  $region1: #{efficientnet_b1_forward.1} parent=0
    #allocation2 [shape = 'u8[10240]{0}', space=vmem, size = 0x2800, scoped, tag = 'output window, operand 0, single buffered']
    #allocation3 [shape = 's32[1]{0}', space=sflag, size = 0x4, scoped, tag = 'scoped memory for efficientnet_b1_forward.1']
    #allocation4 [shape = 'u8[1024]{0}', space=vmem, size = 0x400, scoped, tag = 'output window, operand 1, single buffered']
    #allocation5 [shape = 's32[1]{0}', space=sflag, size = 0x4, scoped, tag = 'scoped memory for efficientnet_b1_forward.1']
    %10 = vsyncpa [#allocation3], 0
    %11 = vsyncpa [#allocation5], 0
    // Predicated region
    $region2: #{efficientnet_b1_forward.1} parent=1 // pred_check
      _
    $region3: #{efficientnet_b1_forward.1} parent=1 // pred_check_branch
      %13 = sbr.rel (0) target = $region5
    $region4: #{efficientnet_b1_forward.1} parent=1 // pred_region
      _
    $region5: #{efficientnet_b1_forward.1} parent=1 // pred_fallthru
      _
    // Predicated region
    $region6: #{efficientnet_b1_forward.1} parent=1 // pred_check
      _
    $region7: #{efficientnet_b1_forward.1} parent=1 // pred_check_branch
      %15 = sbr.rel (0) target = $region9
    $region8: #{efficientnet_b1_forward.1} parent=1 // pred_region
      _
    $region9: #{efficientnet_b1_forward.1} parent=1 // pred_fallthru
      _
    // Predicated region
    $region10: #{efficientnet_b1_forward.1} parent=1 // pred_check
      _
    $region11: #{efficientnet_b1_forward.1} parent=1 // pred_check_branch
      %17 = sbr.rel (0) target = $region13
    $region12: #{efficientnet_b1_forward.1} parent=1 // pred_region
      _
    $region13: #{efficientnet_b1_forward.1} parent=1 // pred_fallthru
      _
    %v18 = vld [vmem:[%s0] sm:$0xff]
    %v19 = vld [vmem:[%s0 + $0x8] sm:$0xff]
    %v20 = vld [vmem:[%s0 + $0x10] sm:$0xff]
    %v21 = vld [vmem:[%s0 + $0x18] sm:$0xff]
    %v22 = vld [vmem:[%s0 + $0x20] sm:$0xff]
    %v23 = vld [vmem:[%s0 + $0x28] sm:$0xff]
    %v24 = vld [vmem:[%s0 + $0x30] sm:$0xff]
    %v25 = vld [vmem:[%s0 + $0x38] sm:$0xff]
    %v26 = vld [vmem:[%s0 + $0x40] sm:$0xff]
    %v27 = vld [vmem:[%s0 + $0x48] sm:$0xff]
    %v38 = vcombine.high %v18, %v18
    %v39 = vcombine.high %v19, %v19
    %v40 = vcombine.high %v20, %v20
    %v41 = vcombine.high %v21, %v21
    %v42 = vcombine.high %v22, %v22
    %v43 = vcombine.high %v23, %v23
    %v44 = vcombine.high %v24, %v24
    %v45 = vcombine.high %v25, %v25
    %v46 = vcombine.high %v26, %v26
    %v47 = vcombine.high %v27, %v27
    %vm58 = vcmask 1043456
    %v59 = vsel %vm58, %v18, 0.0
    %v60 = vrot.slane %v59, 4
    %v61 = vadd.f32 %v59, %v60
    %v62 = vrot.slane %v61, 2
    %v63 = vadd.f32 %v61, %v62
    %v64 = vrot.slane %v63, 1
    %v65 = vadd.f32 %v63, %v64
    %v66 = vsel %vm58, %v38, 0.0
    %v67 = vrot.slane %v66, 4
    %v68 = vadd.f32 %v66, %v67
    %v69 = vrot.slane %v68, 2
    %v70 = vadd.f32 %v68, %v69
    %v71 = vrot.slane %v70, 1
    %v72 = vadd.f32 %v70, %v71
    %v73 = vsel %vm58, %v19, 0.0
    %v74 = vrot.slane %v73, 4
    %v75 = vadd.f32 %v73, %v74
    %v76 = vrot.slane %v75, 2
    %v77 = vadd.f32 %v75, %v76
    %v78 = vrot.slane %v77, 1
    %v79 = vadd.f32 %v77, %v78
    %v80 = vsel %vm58, %v39, 0.0
    %v81 = vrot.slane %v80, 4
    %v82 = vadd.f32 %v80, %v81
    %v83 = vrot.slane %v82, 2
    %v84 = vadd.f32 %v82, %v83
    %v85 = vrot.slane %v84, 1
    %v86 = vadd.f32 %v84, %v85
    %v87 = vsel %vm58, %v20, 0.0
    %v88 = vrot.slane %v87, 4
    %v89 = vadd.f32 %v87, %v88
    %v90 = vrot.slane %v89, 2
    %v91 = vadd.f32 %v89, %v90
    %v92 = vrot.slane %v91, 1
    %v93 = vadd.f32 %v91, %v92
    %v94 = vsel %vm58, %v40, 0.0
    %v95 = vrot.slane %v94, 4
    %v96 = vadd.f32 %v94, %v95
    %v97 = vrot.slane %v96, 2
    %v98 = vadd.f32 %v96, %v97
    %v99 = vrot.slane %v98, 1
    %v100 = vadd.f32 %v98, %v99
    %v101 = vsel %vm58, %v21, 0.0
    %v102 = vrot.slane %v101, 4
    %v103 = vadd.f32 %v101, %v102
    %v104 = vrot.slane %v103, 2
    %v105 = vadd.f32 %v103, %v104
    %v106 = vrot.slane %v105, 1
    %v107 = vadd.f32 %v105, %v106
    %v108 = vsel %vm58, %v41, 0.0
    %v109 = vrot.slane %v108, 4
    %v110 = vadd.f32 %v108, %v109
    %v111 = vrot.slane %v110, 2
    %v112 = vadd.f32 %v110, %v111
    %v113 = vrot.slane %v112, 1
    %v114 = vadd.f32 %v112, %v113
    %v115 = vsel %vm58, %v22, 0.0
    %v116 = vrot.slane %v115, 4
    %v117 = vadd.f32 %v115, %v116
    %v118 = vrot.slane %v117, 2
    %v119 = vadd.f32 %v117, %v118
    %v120 = vrot.slane %v119, 1
    %v121 = vadd.f32 %v119, %v120
    %v122 = vsel %vm58, %v42, 0.0
    %v123 = vrot.slane %v122, 4
    %v124 = vadd.f32 %v122, %v123
    %v125 = vrot.slane %v124, 2
    %v126 = vadd.f32 %v124, %v125
    %v127 = vrot.slane %v126, 1
    %v128 = vadd.f32 %v126, %v127
    %v129 = vsel %vm58, %v23, 0.0
    %v130 = vrot.slane %v129, 4
    %v131 = vadd.f32 %v129, %v130
    %v132 = vrot.slane %v131, 2
    %v133 = vadd.f32 %v131, %v132
    %v134 = vrot.slane %v133, 1
    %v135 = vadd.f32 %v133, %v134
    %v136 = vsel %vm58, %v43, 0.0
    %v137 = vrot.slane %v136, 4
    %v138 = vadd.f32 %v136, %v137
    %v139 = vrot.slane %v138, 2
    %v140 = vadd.f32 %v138, %v139
    %v141 = vrot.slane %v140, 1
    %v142 = vadd.f32 %v140, %v141
    %v143 = vsel %vm58, %v24, 0.0
    %v144 = vrot.slane %v143, 4
    %v145 = vadd.f32 %v143, %v144
    %v146 = vrot.slane %v145, 2
    %v147 = vadd.f32 %v145, %v146
    %v148 = vrot.slane %v147, 1
    %v149 = vadd.f32 %v147, %v148
    %v150 = vsel %vm58, %v44, 0.0
    %v151 = vrot.slane %v150, 4
    %v152 = vadd.f32 %v150, %v151
    %v153 = vrot.slane %v152, 2
    %v154 = vadd.f32 %v152, %v153
    %v155 = vrot.slane %v154, 1
    %v156 = vadd.f32 %v154, %v155
    %v157 = vsel %vm58, %v25, 0.0
    %v158 = vrot.slane %v157, 4
    %v159 = vadd.f32 %v157, %v158
    %v160 = vrot.slane %v159, 2
    %v161 = vadd.f32 %v159, %v160
    %v162 = vrot.slane %v161, 1
    %v163 = vadd.f32 %v161, %v162
    %v164 = vsel %vm58, %v45, 0.0
    %v165 = vrot.slane %v164, 4
    %v166 = vadd.f32 %v164, %v165
    %v167 = vrot.slane %v166, 2
    %v168 = vadd.f32 %v166, %v167
    %v169 = vrot.slane %v168, 1
    %v170 = vadd.f32 %v168, %v169
    %v171 = vsel %vm58, %v26, 0.0
    %v172 = vrot.slane %v171, 4
    %v173 = vadd.f32 %v171, %v172
    %v174 = vrot.slane %v173, 2
    %v175 = vadd.f32 %v173, %v174
    %v176 = vrot.slane %v175, 1
    %v177 = vadd.f32 %v175, %v176
    %v178 = vsel %vm58, %v46, 0.0
    %v179 = vrot.slane %v178, 4
    %v180 = vadd.f32 %v178, %v179
    %v181 = vrot.slane %v180, 2
    %v182 = vadd.f32 %v180, %v181
    %v183 = vrot.slane %v182, 1
    %v184 = vadd.f32 %v182, %v183
    %v185 = vsel %vm58, %v27, 0.0
    %v186 = vrot.slane %v185, 4
    %v187 = vadd.f32 %v185, %v186
    %v188 = vrot.slane %v187, 2
    %v189 = vadd.f32 %v187, %v188
    %v190 = vrot.slane %v189, 1
    %v191 = vadd.f32 %v189, %v190
    %v192 = vsel %vm58, %v47, 0.0
    %v193 = vrot.slane %v192, 4
    %v194 = vadd.f32 %v192, %v193
    %v195 = vrot.slane %v194, 2
    %v196 = vadd.f32 %v194, %v195
    %v197 = vrot.slane %v196, 1
    %v198 = vadd.f32 %v196, %v197
    %v199 = vmul.f32 %v65, 0.25
    %v200 = vmul.f32 %v72, 0.25
    %v201 = vmul.f32 %v79, 0.25
    %v202 = vmul.f32 %v86, 0.25
    %v203 = vmul.f32 %v93, 0.25
    %v204 = vmul.f32 %v100, 0.25
    %v205 = vmul.f32 %v107, 0.25
    %v206 = vmul.f32 %v114, 0.25
    %v207 = vmul.f32 %v121, 0.25
    %v208 = vmul.f32 %v128, 0.25
    %v209 = vmul.f32 %v135, 0.25
    %v210 = vmul.f32 %v142, 0.25
    %v211 = vmul.f32 %v149, 0.25
    %v212 = vmul.f32 %v156, 0.25
    %v213 = vmul.f32 %v163, 0.25
    %v214 = vmul.f32 %v170, 0.25
    %v215 = vmul.f32 %v177, 0.25
    %v216 = vmul.f32 %v184, 0.25
    %v217 = vmul.f32 %v191, 0.25
    %v218 = vmul.f32 %v198, 0.25
    %v239 = vcombine.low %v199, %v200
    %v240 = vcombine.low %v201, %v202
    %v242 = vunpack.c.l.s4 1983009808
    %v243 = vunpack.c.0.s8 %v242
    %v244 = vlaneseq
    %v245 = vshrl.u32 %v244, 7
    %v246 = vsub.s32 %v243, %v245
    %v247 = vrot.slane %v239, %v246
    %v249 = vunpack.c.l.s4 1983009808
    %v250 = vunpack.c.0.s8 %v249
    %v251 = vlaneseq
    %v252 = vshrl.u32 %v251, 7
    %v253 = vsub.s32 %v250, %v252
    %v254 = vrot.slane %v240, %v253
    %v255 = vcombine.low %v247, %v254
    %v256 = vcombine.low %v203, %v204
    %v257 = vcombine.low %v205, %v206
    %v259 = vunpack.c.l.s4 1983009808
    %v260 = vunpack.c.0.s8 %v259
    %v261 = vlaneseq
    %v262 = vshrl.u32 %v261, 7
    %v263 = vsub.s32 %v260, %v262
    %v264 = vrot.slane %v256, %v263
    %v266 = vunpack.c.l.s4 1983009808
    %v267 = vunpack.c.0.s8 %v266
    %v268 = vlaneseq
    %v269 = vshrl.u32 %v268, 7
    %v270 = vsub.s32 %v267, %v269
    %v271 = vrot.slane %v257, %v270
    %v272 = vcombine.low %v264, %v271
    %v273 = vcombine.low %v207, %v208
    %v275 = vunpack.c.l.s4 1983009808
    %v276 = vunpack.c.0.s8 %v275
    %v277 = vlaneseq
    %v278 = vshrl.u32 %v277, 7
    %v279 = vsub.s32 %v276, %v278
    %v280 = vrot.slane %v273, %v279
    %v281 = vcombine.low %v209, %v210
    %v282 = vcombine.low %v211, %v212
    %v284 = vunpack.c.l.s4 1983009808
    %v285 = vunpack.c.0.s8 %v284
    %v286 = vlaneseq
    %v287 = vshrl.u32 %v286, 7
    %v288 = vsub.s32 %v285, %v287
    %v289 = vrot.slane %v281, %v288
    %v291 = vunpack.c.l.s4 1983009808
    %v292 = vunpack.c.0.s8 %v291
    %v293 = vlaneseq
    %v294 = vshrl.u32 %v293, 7
    %v295 = vsub.s32 %v292, %v294
    %v296 = vrot.slane %v282, %v295
    %v297 = vcombine.low %v289, %v296
    %v298 = vcombine.low %v213, %v214
    %v299 = vcombine.low %v215, %v216
    %v301 = vunpack.c.l.s4 1983009808
    %v302 = vunpack.c.0.s8 %v301
    %v303 = vlaneseq
    %v304 = vshrl.u32 %v303, 7
    %v305 = vsub.s32 %v302, %v304
    %v306 = vrot.slane %v298, %v305
    %v308 = vunpack.c.l.s4 1983009808
    %v309 = vunpack.c.0.s8 %v308
    %v310 = vlaneseq
    %v311 = vshrl.u32 %v310, 7
    %v312 = vsub.s32 %v309, %v311
    %v313 = vrot.slane %v299, %v312
    %v314 = vcombine.low %v306, %v313
    %v315 = vcombine.low %v217, %v218
    %v317 = vunpack.c.l.s4 1983009808
    %v318 = vunpack.c.0.s8 %v317
    %v319 = vlaneseq
    %v320 = vshrl.u32 %v319, 7
    %v321 = vsub.s32 %v318, %v320
    %v322 = vrot.slane %v315, %v321
    %vm323 = vcmask 1044484
    %v324 = vsel %vm323, %v255, %v255
    %vm325 = vcmask 1046534
    %v326 = vsel %vm325, %v255, %v324
    %v327 = vrot.slane %v297, 7
    %vm328 = vcmask 1041409
    %v329 = vsel %vm328, %v327, %v326
    %vm330 = vcmask 1043459
    %v331 = vsel %vm330, %v327, %v329
    %vm332 = vcmask 1045509
    %v333 = vsel %vm332, %v327, %v331
    %vm334 = vcmask 1047559
    %v335 = vsel %vm334, %v327, %v333
    %v336 = vsel %vm323, %v272, %v272
    %v337 = vsel %vm325, %v272, %v336
    %v338 = vrot.slane %v314, 7
    %v339 = vsel %vm328, %v338, %v337
    %v340 = vsel %vm330, %v338, %v339
    %v341 = vsel %vm332, %v338, %v340
    %v342 = vsel %vm334, %v338, %v341
    %v343 = vsel %vm323, %v280, %v280
    %v344 = vsel %vm325, %v280, %v343
    %v345 = vrot.slane %v322, 7
    %v346 = vsel %vm328, %v345, %v344
    %v347 = vsel %vm330, %v345, %v346
    %v348 = vsel %vm332, %v345, %v347
    %v349 = vsel %vm334, %v345, %v348
    %353 = vst [vmem:[#allocation2] sm:$0xff] %v335
    %354 = vst [vmem:[#allocation2 + $0x8] sm:$0xff] %v342
    %355 = vst [vmem:[#allocation2 + $0x10] sm:$0xf] %v349
    %v356 = vld [vmem:[%s1] sm:$0xff]
    %v357 = vld [vmem:[%s1 + $0x8] sm:$0xff]
    %v358 = vld [vmem:[%s1 + $0x10] sm:$0xff]
    %v359 = vld [vmem:[%s1 + $0x18] sm:$0xff]
    %v360 = vld [vmem:[%s1 + $0x20] sm:$0xff]
    %v361 = vld [vmem:[%s1 + $0x28] sm:$0xff]
    %v362 = vld [vmem:[%s1 + $0x30] sm:$0xff]
    %v363 = vld [vmem:[%s1 + $0x38] sm:$0xff]
    %v364 = vld [vmem:[%s1 + $0x40] sm:$0xff]
    %v365 = vld [vmem:[%s1 + $0x48] sm:$0xff]
    %v366 = vld [vmem:[%s1 + $0x50] sm:$0x3]
    %v367 = vld [vmem:[%s1 + $0x58] sm:$0x3]
    %v368 = vld [vmem:[%s1 + $0x60] sm:$0x3]
    %v369 = vld [vmem:[%s1 + $0x68] sm:$0x3]
    %v370 = vld [vmem:[%s1 + $0x70] sm:$0x3]
    %v371 = vld [vmem:[%s1 + $0x78] sm:$0x3]
    %v372 = vld [vmem:[%s1 + $0x80] sm:$0x3]
    %v373 = vld [vmem:[%s1 + $0x88] sm:$0x3]
    %v374 = vld [vmem:[%s1 + $0x90] sm:$0x3]
    %v375 = vld [vmem:[%s1 + $0x98] sm:$0x3]
    %v376 = vld [vmem:[%s2] sm:$0x1]
    %v378 = vlaneseq
    %v379 = vshrl.u32 %v378, 7
    %v380 = vsub.s32 0, %v379
    %v381 = vrot.slane %v376, %v380
    %v383 = vsel %vm328, %v209, %v199
    %v384 = vsel %vm328, %v210, %v200
    %v385 = vsel %vm328, %v211, %v201
    %v386 = vsel %vm328, %v212, %v202
    %v387 = vsel %vm328, %v213, %v203
    %v388 = vsel %vm328, %v214, %v204
    %v389 = vsel %vm328, %v215, %v205
    %v390 = vsel %vm328, %v216, %v206
    %v391 = vsel %vm328, %v217, %v207
    %v392 = vsel %vm328, %v218, %v208
    %403 = vmatprep.subr.mxu0 %v357
    %404 = vmatpush1.xpose.msra.mxu0 %v356
    %405 = vmatprep.subr.mxu0 %v367
    %406 = vmatpush1.xpose.msra.mxu0 %v366
    %407 = vmatprep.subr.mxu0 0.0
    %408 = vmatpush1.xpose.msra.mxu0 0.0
    %409 = vmatprep.subr.mxu0 0.0
    %410 = vmatpush1.xpose.msra.mxu0 0.0
    %411 = vmatprep.subr.mxu0 0.0
    %412 = vmatpush1.xpose.msra.mxu0 0.0
    %413 = vmatprep.subr.mxu0 0.0
    %414 = vmatpush1.xpose.msra.mxu0 0.0
    %415 = vmatprep.subr.mxu0 0.0
    %416 = vmatpush1.xpose.msra.mxu0 0.0
    %417 = vmatprep.subr.mxu0 0.0
    %418 = vmatpush1.xpose.msra.mxu0 0.0
    %419 = vmatprep.subr.mxu0 0.0
    %420 = vmatpush1.xpose.msra.mxu0 0.0
    %421 = vmatprep.subr.mxu0 0.0
    %422 = vmatpush1.xpose.msra.mxu0 0.0
    %423 = vmatprep.subr.mxu0 0.0
    %424 = vmatpush1.xpose.msra.mxu0 0.0
    %425 = vmatprep.subr.mxu0 0.0
    %426 = vmatpush1.xpose.msra.mxu0 0.0
    %427 = vmatprep.subr.mxu0 0.0
    %428 = vmatpush1.xpose.msra.mxu0 0.0
    %429 = vmatprep.subr.mxu0 0.0
    %430 = vmatpush1.xpose.msra.mxu0 0.0
    %431 = vmatprep.subr.mxu0 0.0
    %432 = vmatpush1.xpose.msra.mxu0 0.0
    %433 = vmatprep.subr.mxu0 0.0
    %434 = vmatpush1.xpose.msra.mxu0 0.0
    %435 = vmatprep.subr.mxu0 0.0
    %436 = vmatpush1.xpose.msra.mxu0 0.0
    %437 = vmatprep.subr.mxu0 0.0
    %438 = vmatpush1.xpose.msra.mxu0 0.0
    %439 = vmatprep.subr.mxu0 0.0
    %440 = vmatpush1.xpose.msra.mxu0 0.0
    %441 = vmatprep.subr.mxu0 0.0
    %442 = vmatpush1.xpose.msra.mxu0 0.0
    %443 = vmatprep.subr.mxu0 0.0
    %444 = vmatpush1.xpose.msra.mxu0 0.0
    %445 = vmatprep.subr.mxu0 0.0
    %446 = vmatpush1.xpose.msra.mxu0 0.0
    %447 = vmatprep.subr.mxu0 0.0
    %448 = vmatpush1.xpose.msra.mxu0 0.0
    %449 = vmatprep.subr.mxu0 0.0
    %450 = vmatpush1.xpose.msra.mxu0 0.0
    %451 = vmatprep.subr.mxu0 0.0
    %452 = vmatpush1.xpose.msra.mxu0 0.0
    %453 = vmatprep.subr.mxu0 0.0
    %454 = vmatpush1.xpose.msra.mxu0 0.0
    %455 = vmatprep.subr.mxu0 0.0
    %456 = vmatpush1.xpose.msra.mxu0 0.0
    %457 = vmatprep.subr.mxu0 0.0
    %458 = vmatpush1.xpose.msra.mxu0 0.0
    %459 = vmatprep.subr.mxu0 0.0
    %460 = vmatpush1.xpose.msra.mxu0 0.0
    %461 = vmatprep.subr.mxu0 0.0
    %462 = vmatpush1.xpose.msra.mxu0 0.0
    %463 = vmatprep.subr.mxu0 0.0
    %464 = vmatpush1.xpose.msra.mxu0 0.0
    %465 = vmatprep.subr.mxu0 0.0
    %466 = vmatpush1.xpose.msra.mxu0 0.0
    %467 = vmatprep.mubr.f32.mxu0 %v384
    %468 = vmatmul.mubr.f32.gmra.mrb[0].mxu0 %v383
    %v469 = vpop.f32.mrb[0].mxu0
    %v470 = vadd.f32 %v381, %v469
    %v471 = vpop.f32.mrb[0].mxu0
    %472 = vdwg.mxu0
    %473 = vmatprep.subr.mxu0 %v359
    %474 = vmatpush1.xpose.msra.mxu0 %v358
    %475 = vmatprep.subr.mxu0 %v369
    %476 = vmatpush1.xpose.msra.mxu0 %v368
    %477 = vmatprep.subr.mxu0 0.0
    %478 = vmatpush1.xpose.msra.mxu0 0.0
    %479 = vmatprep.subr.mxu0 0.0
    %480 = vmatpush1.xpose.msra.mxu0 0.0
    %481 = vmatprep.subr.mxu0 0.0
    %482 = vmatpush1.xpose.msra.mxu0 0.0
    %483 = vmatprep.subr.mxu0 0.0
    %484 = vmatpush1.xpose.msra.mxu0 0.0
    %485 = vmatprep.subr.mxu0 0.0
    %486 = vmatpush1.xpose.msra.mxu0 0.0
    %487 = vmatprep.subr.mxu0 0.0
    %488 = vmatpush1.xpose.msra.mxu0 0.0
    %489 = vmatprep.subr.mxu0 0.0
    %490 = vmatpush1.xpose.msra.mxu0 0.0
    %491 = vmatprep.subr.mxu0 0.0
    %492 = vmatpush1.xpose.msra.mxu0 0.0
    %493 = vmatprep.subr.mxu0 0.0
    %494 = vmatpush1.xpose.msra.mxu0 0.0
    %495 = vmatprep.subr.mxu0 0.0
    %496 = vmatpush1.xpose.msra.mxu0 0.0
    %497 = vmatprep.subr.mxu0 0.0
    %498 = vmatpush1.xpose.msra.mxu0 0.0
    %499 = vmatprep.subr.mxu0 0.0
    %500 = vmatpush1.xpose.msra.mxu0 0.0
    %501 = vmatprep.subr.mxu0 0.0
    %502 = vmatpush1.xpose.msra.mxu0 0.0
    %503 = vmatprep.subr.mxu0 0.0
    %504 = vmatpush1.xpose.msra.mxu0 0.0
    %505 = vmatprep.subr.mxu0 0.0
    %506 = vmatpush1.xpose.msra.mxu0 0.0
    %507 = vmatprep.subr.mxu0 0.0
    %508 = vmatpush1.xpose.msra.mxu0 0.0
    %509 = vmatprep.subr.mxu0 0.0
    %510 = vmatpush1.xpose.msra.mxu0 0.0
    %511 = vmatprep.subr.mxu0 0.0
    %512 = vmatpush1.xpose.msra.mxu0 0.0
    %513 = vmatprep.subr.mxu0 0.0
    %514 = vmatpush1.xpose.msra.mxu0 0.0
    %515 = vmatprep.subr.mxu0 0.0
    %516 = vmatpush1.xpose.msra.mxu0 0.0
    %517 = vmatprep.subr.mxu0 0.0
    %518 = vmatpush1.xpose.msra.mxu0 0.0
    %519 = vmatprep.subr.mxu0 0.0
    %520 = vmatpush1.xpose.msra.mxu0 0.0
    %521 = vmatprep.subr.mxu0 0.0
    %522 = vmatpush1.xpose.msra.mxu0 0.0
    %523 = vmatprep.subr.mxu0 0.0
    %524 = vmatpush1.xpose.msra.mxu0 0.0
    %525 = vmatprep.subr.mxu0 0.0
    %526 = vmatpush1.xpose.msra.mxu0 0.0
    %527 = vmatprep.subr.mxu0 0.0
    %528 = vmatpush1.xpose.msra.mxu0 0.0
    %529 = vmatprep.subr.mxu0 0.0
    %530 = vmatpush1.xpose.msra.mxu0 0.0
    %531 = vmatprep.subr.mxu0 0.0
    %532 = vmatpush1.xpose.msra.mxu0 0.0
    %533 = vmatprep.subr.mxu0 0.0
    %534 = vmatpush1.xpose.msra.mxu0 0.0
    %535 = vmatprep.subr.mxu0 0.0
    %536 = vmatpush1.xpose.msra.mxu0 0.0
    %537 = vmatprep.mubr.f32.mxu0 %v386
    %538 = vmatmul.mubr.f32.gmra.mrb[0].mxu0 %v385
    %v539 = vpop.f32.mrb[0].mxu0
    %v540 = vadd.f32 %v470, %v539
    %v541 = vpop.f32.mrb[0].mxu0
    %542 = vdwg.mxu0
    %543 = vmatprep.subr.mxu0 %v361
    %544 = vmatpush1.xpose.msra.mxu0 %v360
    %545 = vmatprep.subr.mxu0 %v371
    %546 = vmatpush1.xpose.msra.mxu0 %v370
    %547 = vmatprep.subr.mxu0 0.0
    %548 = vmatpush1.xpose.msra.mxu0 0.0
    %549 = vmatprep.subr.mxu0 0.0
    %550 = vmatpush1.xpose.msra.mxu0 0.0
    %551 = vmatprep.subr.mxu0 0.0
    %552 = vmatpush1.xpose.msra.mxu0 0.0
    %553 = vmatprep.subr.mxu0 0.0
    %554 = vmatpush1.xpose.msra.mxu0 0.0
    %555 = vmatprep.subr.mxu0 0.0
    %556 = vmatpush1.xpose.msra.mxu0 0.0
    %557 = vmatprep.subr.mxu0 0.0
    %558 = vmatpush1.xpose.msra.mxu0 0.0
    %559 = vmatprep.subr.mxu0 0.0
    %560 = vmatpush1.xpose.msra.mxu0 0.0
    %561 = vmatprep.subr.mxu0 0.0
    %562 = vmatpush1.xpose.msra.mxu0 0.0
    %563 = vmatprep.subr.mxu0 0.0
    %564 = vmatpush1.xpose.msra.mxu0 0.0
    %565 = vmatprep.subr.mxu0 0.0
    %566 = vmatpush1.xpose.msra.mxu0 0.0
    %567 = vmatprep.subr.mxu0 0.0
    %568 = vmatpush1.xpose.msra.mxu0 0.0
    %569 = vmatprep.subr.mxu0 0.0
    %570 = vmatpush1.xpose.msra.mxu0 0.0
    %571 = vmatprep.subr.mxu0 0.0
    %572 = vmatpush1.xpose.msra.mxu0 0.0
    %573 = vmatprep.subr.mxu0 0.0
    %574 = vmatpush1.xpose.msra.mxu0 0.0
    %575 = vmatprep.subr.mxu0 0.0
    %576 = vmatpush1.xpose.msra.mxu0 0.0
    %577 = vmatprep.subr.mxu0 0.0
    %578 = vmatpush1.xpose.msra.mxu0 0.0
    %579 = vmatprep.subr.mxu0 0.0
    %580 = vmatpush1.xpose.msra.mxu0 0.0
    %581 = vmatprep.subr.mxu0 0.0
    %582 = vmatpush1.xpose.msra.mxu0 0.0
    %583 = vmatprep.subr.mxu0 0.0
    %584 = vmatpush1.xpose.msra.mxu0 0.0
    %585 = vmatprep.subr.mxu0 0.0
    %586 = vmatpush1.xpose.msra.mxu0 0.0
    %587 = vmatprep.subr.mxu0 0.0
    %588 = vmatpush1.xpose.msra.mxu0 0.0
    %589 = vmatprep.subr.mxu0 0.0
    %590 = vmatpush1.xpose.msra.mxu0 0.0
    %591 = vmatprep.subr.mxu0 0.0
    %592 = vmatpush1.xpose.msra.mxu0 0.0
    %593 = vmatprep.subr.mxu0 0.0
    %594 = vmatpush1.xpose.msra.mxu0 0.0
    %595 = vmatprep.subr.mxu0 0.0
    %596 = vmatpush1.xpose.msra.mxu0 0.0
    %597 = vmatprep.subr.mxu0 0.0
    %598 = vmatpush1.xpose.msra.mxu0 0.0
    %599 = vmatprep.subr.mxu0 0.0
    %600 = vmatpush1.xpose.msra.mxu0 0.0
    %601 = vmatprep.subr.mxu0 0.0
    %602 = vmatpush1.xpose.msra.mxu0 0.0
    %603 = vmatprep.subr.mxu0 0.0
    %604 = vmatpush1.xpose.msra.mxu0 0.0
    %605 = vmatprep.subr.mxu0 0.0
    %606 = vmatpush1.xpose.msra.mxu0 0.0
    %607 = vmatprep.mubr.f32.mxu0 %v388
    %608 = vmatmul.mubr.f32.gmra.mrb[0].mxu0 %v387
    %v609 = vpop.f32.mrb[0].mxu0
    %v610 = vadd.f32 %v540, %v609
    %v611 = vpop.f32.mrb[0].mxu0
    %612 = vdwg.mxu0
    %613 = vmatprep.subr.mxu0 %v363
    %614 = vmatpush1.xpose.msra.mxu0 %v362
    %615 = vmatprep.subr.mxu0 %v373
    %616 = vmatpush1.xpose.msra.mxu0 %v372
    %617 = vmatprep.subr.mxu0 0.0
    %618 = vmatpush1.xpose.msra.mxu0 0.0
    %619 = vmatprep.subr.mxu0 0.0
    %620 = vmatpush1.xpose.msra.mxu0 0.0
    %621 = vmatprep.subr.mxu0 0.0
    %622 = vmatpush1.xpose.msra.mxu0 0.0
    %623 = vmatprep.subr.mxu0 0.0
    %624 = vmatpush1.xpose.msra.mxu0 0.0
    %625 = vmatprep.subr.mxu0 0.0
    %626 = vmatpush1.xpose.msra.mxu0 0.0
    %627 = vmatprep.subr.mxu0 0.0
    %628 = vmatpush1.xpose.msra.mxu0 0.0
    %629 = vmatprep.subr.mxu0 0.0
    %630 = vmatpush1.xpose.msra.mxu0 0.0
    %631 = vmatprep.subr.mxu0 0.0
    %632 = vmatpush1.xpose.msra.mxu0 0.0
    %633 = vmatprep.subr.mxu0 0.0
    %634 = vmatpush1.xpose.msra.mxu0 0.0
    %635 = vmatprep.subr.mxu0 0.0
    %636 = vmatpush1.xpose.msra.mxu0 0.0
    %637 = vmatprep.subr.mxu0 0.0
    %638 = vmatpush1.xpose.msra.mxu0 0.0
    %639 = vmatprep.subr.mxu0 0.0
    %640 = vmatpush1.xpose.msra.mxu0 0.0
    %641 = vmatprep.subr.mxu0 0.0
    %642 = vmatpush1.xpose.msra.mxu0 0.0
    %643 = vmatprep.subr.mxu0 0.0
    %644 = vmatpush1.xpose.msra.mxu0 0.0
    %645 = vmatprep.subr.mxu0 0.0
    %646 = vmatpush1.xpose.msra.mxu0 0.0
    %647 = vmatprep.subr.mxu0 0.0
    %648 = vmatpush1.xpose.msra.mxu0 0.0
    %649 = vmatprep.subr.mxu0 0.0
    %650 = vmatpush1.xpose.msra.mxu0 0.0
    %651 = vmatprep.subr.mxu0 0.0
    %652 = vmatpush1.xpose.msra.mxu0 0.0
    %653 = vmatprep.subr.mxu0 0.0
    %654 = vmatpush1.xpose.msra.mxu0 0.0
    %655 = vmatprep.subr.mxu0 0.0
    %656 = vmatpush1.xpose.msra.mxu0 0.0
    %657 = vmatprep.subr.mxu0 0.0
    %658 = vmatpush1.xpose.msra.mxu0 0.0
    %659 = vmatprep.subr.mxu0 0.0
    %660 = vmatpush1.xpose.msra.mxu0 0.0
    %661 = vmatprep.subr.mxu0 0.0
    %662 = vmatpush1.xpose.msra.mxu0 0.0
    %663 = vmatprep.subr.mxu0 0.0
    %664 = vmatpush1.xpose.msra.mxu0 0.0
    %665 = vmatprep.subr.mxu0 0.0
    %666 = vmatpush1.xpose.msra.mxu0 0.0
    %667 = vmatprep.subr.mxu0 0.0
    %668 = vmatpush1.xpose.msra.mxu0 0.0
    %669 = vmatprep.subr.mxu0 0.0
    %670 = vmatpush1.xpose.msra.mxu0 0.0
    %671 = vmatprep.subr.mxu0 0.0
    %672 = vmatpush1.xpose.msra.mxu0 0.0
    %673 = vmatprep.subr.mxu0 0.0
    %674 = vmatpush1.xpose.msra.mxu0 0.0
    %675 = vmatprep.subr.mxu0 0.0
    %676 = vmatpush1.xpose.msra.mxu0 0.0
    %677 = vmatprep.mubr.f32.mxu0 %v390
    %678 = vmatmul.mubr.f32.gmra.mrb[0].mxu0 %v389
    %v679 = vpop.f32.mrb[0].mxu0
    %v680 = vadd.f32 %v610, %v679
    %v681 = vpop.f32.mrb[0].mxu0
    %682 = vdwg.mxu0
    %683 = vmatprep.subr.mxu0 %v365
    %684 = vmatpush1.xpose.msra.mxu0 %v364
    %685 = vmatprep.subr.mxu0 %v375
    %686 = vmatpush1.xpose.msra.mxu0 %v374
    %687 = vmatprep.subr.mxu0 0.0
    %688 = vmatpush1.xpose.msra.mxu0 0.0
    %689 = vmatprep.subr.mxu0 0.0
    %690 = vmatpush1.xpose.msra.mxu0 0.0
    %691 = vmatprep.subr.mxu0 0.0
    %692 = vmatpush1.xpose.msra.mxu0 0.0
    %693 = vmatprep.subr.mxu0 0.0
    %694 = vmatpush1.xpose.msra.mxu0 0.0
    %695 = vmatprep.subr.mxu0 0.0
    %696 = vmatpush1.xpose.msra.mxu0 0.0
    %697 = vmatprep.subr.mxu0 0.0
    %698 = vmatpush1.xpose.msra.mxu0 0.0
    %699 = vmatprep.subr.mxu0 0.0
    %700 = vmatpush1.xpose.msra.mxu0 0.0
    %701 = vmatprep.subr.mxu0 0.0
    %702 = vmatpush1.xpose.msra.mxu0 0.0
    %703 = vmatprep.subr.mxu0 0.0
    %704 = vmatpush1.xpose.msra.mxu0 0.0
    %705 = vmatprep.subr.mxu0 0.0
    %706 = vmatpush1.xpose.msra.mxu0 0.0
    %707 = vmatprep.subr.mxu0 0.0
    %708 = vmatpush1.xpose.msra.mxu0 0.0
    %709 = vmatprep.subr.mxu0 0.0
    %710 = vmatpush1.xpose.msra.mxu0 0.0
    %711 = vmatprep.subr.mxu0 0.0
    %712 = vmatpush1.xpose.msra.mxu0 0.0
    %713 = vmatprep.subr.mxu0 0.0
    %714 = vmatpush1.xpose.msra.mxu0 0.0
    %715 = vmatprep.subr.mxu0 0.0
    %716 = vmatpush1.xpose.msra.mxu0 0.0
    %717 = vmatprep.subr.mxu0 0.0
    %718 = vmatpush1.xpose.msra.mxu0 0.0
    %719 = vmatprep.subr.mxu0 0.0
    %720 = vmatpush1.xpose.msra.mxu0 0.0
    %721 = vmatprep.subr.mxu0 0.0
    %722 = vmatpush1.xpose.msra.mxu0 0.0
    %723 = vmatprep.subr.mxu0 0.0
    %724 = vmatpush1.xpose.msra.mxu0 0.0
    %725 = vmatprep.subr.mxu0 0.0
    %726 = vmatpush1.xpose.msra.mxu0 0.0
    %727 = vmatprep.subr.mxu0 0.0
    %728 = vmatpush1.xpose.msra.mxu0 0.0
    %729 = vmatprep.subr.mxu0 0.0
    %730 = vmatpush1.xpose.msra.mxu0 0.0
    %731 = vmatprep.subr.mxu0 0.0
    %732 = vmatpush1.xpose.msra.mxu0 0.0
    %733 = vmatprep.subr.mxu0 0.0
    %734 = vmatpush1.xpose.msra.mxu0 0.0
    %735 = vmatprep.subr.mxu0 0.0
    %736 = vmatpush1.xpose.msra.mxu0 0.0
    %737 = vmatprep.subr.mxu0 0.0
    %738 = vmatpush1.xpose.msra.mxu0 0.0
    %739 = vmatprep.subr.mxu0 0.0
    %740 = vmatpush1.xpose.msra.mxu0 0.0
    %741 = vmatprep.subr.mxu0 0.0
    %742 = vmatpush1.xpose.msra.mxu0 0.0
    %743 = vmatprep.subr.mxu0 0.0
    %744 = vmatpush1.xpose.msra.mxu0 0.0
    %745 = vmatprep.subr.mxu0 0.0
    %746 = vmatpush1.xpose.msra.mxu0 0.0
    %747 = vmatprep.mubr.f32.mxu0 %v392
    %748 = vmatmul.mubr.f32.gmra.mrb[0].mxu0 %v391
    %v749 = vpop.f32.mrb[0].mxu0
    %v750 = vadd.f32 %v680, %v749
    %v751 = vpop.f32.mrb[0].mxu0
    %752 = vdwg.mxu0
    %vm753 = vcmask 74752
    %754 = vst.msk [vmem:[#allocation4] sm:$0x3] %vm753, %v750
    // Predicated region
    $region14: #{efficientnet_b1_forward.1} parent=1 // pred_check
      _
    $region15: #{efficientnet_b1_forward.1} parent=1 // pred_check_branch
      %756 = sbr.rel (0) target = $region17
    $region16: #{efficientnet_b1_forward.1} parent=1 // pred_region
      %s758 = ssub.s32 320, 320
      %759 = vsyncadd [#allocation3], %s758
      %s761 = sshll.u32 [#allocation2], 4
      %s762 = int_to_ptr.vmem [resolvable:$true] %s761
      %764 = dma.vmem_to_hbm [thread:$0]  %s762, 320, %s3, [#allocation3]
    $region17: #{efficientnet_b1_forward.1} parent=1 // pred_fallthru
      _
    // Predicated region
    $region18: #{efficientnet_b1_forward.1} parent=1 // pred_check
      _
    $region19: #{efficientnet_b1_forward.1} parent=1 // pred_check_branch
      %766 = sbr.rel (0) target = $region21
    $region20: #{efficientnet_b1_forward.1} parent=1 // pred_region
      %s768 = ssub.s32 32, 32
      %769 = vsyncadd [#allocation5], %s768
      %s771 = sshll.u32 [#allocation4], 4
      %s772 = int_to_ptr.vmem [resolvable:$true] %s771
      %774 = dma.vmem_to_hbm [thread:$0]  %s772, 32, %s4, [#allocation5]
    $region21: #{efficientnet_b1_forward.1} parent=1 // pred_fallthru
      _
    // Predicated region
    $region22: #{efficientnet_b1_forward.1} parent=1 // pred_check
      _
    $region23: #{efficientnet_b1_forward.1} parent=1 // pred_check_branch
      %776 = sbr.rel (0) target = $region25
    $region24: #{efficientnet_b1_forward.1} parent=1 // pred_region
      %777 = dma.done [#allocation3], 320
    $region25: #{efficientnet_b1_forward.1} parent=1 // pred_fallthru
      _
    // Predicated region
    $region26: #{efficientnet_b1_forward.1} parent=1 // pred_check
      _
    $region27: #{efficientnet_b1_forward.1} parent=1 // pred_check_branch
      %779 = sbr.rel (0) target = $region29
    $region28: #{efficientnet_b1_forward.1} parent=1 // pred_region
      %780 = dma.done [#allocation5], 32
    $region29: #{efficientnet_b1_forward.1} parent=1 // pred_fallthru
      _
    %781 = vsyncpa [#allocation3], 1
    %782 = vsyncpa [#allocation5], 1

</llo_original>
